<compile_context>
chip_gen: v7x
topology: tpu7x:2x2x1
jax: 0.10.0
libtpu: 0.0.40
codegen_flags: <defaults>
</compile_context>

<pallas_src>
import functools

import jax
import jax.numpy as jnp
from jax.experimental import pallas as pl
from jax.experimental.pallas import tpu as pltpu

LN_EPS = 1e-5


# ----------------------------------------------------------------------------- helpers
def _round_up(x, m):
    return (x + m - 1) // m * m


def _sublane(dtype):
    return 8 * max(1, 4 // jnp.dtype(dtype).itemsize)


def _pick_tile(n, tm, dtype):
    s = _sublane(dtype)
    tm = max(s, min(tm, _round_up(n, s)))
    return _round_up(tm, s)


def _layer_norm_f32(x, gamma, beta):
    """LayerNorm over the last axis; all operands f32."""
    mu = jnp.mean(x, axis=-1, keepdims=True)
    var = jnp.mean(jnp.square(x - mu), axis=-1, keepdims=True)
    return (x - mu) * jax.lax.rsqrt(var + LN_EPS) * gamma + beta


# ------------------------------------------------------- kernel 1: Linear -> LN -> ReLU
def _linear_ln_relu_kernel(x_ref, w_ref, b_ref, g_ref, bt_ref, o_ref):
    y = jnp.dot(x_ref[...], w_ref[...], preferred_element_type=jnp.float32)
    y = y + b_ref[...].astype(jnp.float32)
    y = _layer_norm_f32(y, g_ref[...].astype(jnp.float32), bt_ref[...].astype(jnp.float32))
    o_ref[...] = jnp.maximum(y, 0.0).astype(o_ref.dtype)


def linear_ln_relu(x, p, *, tm=256):
    w, b, gamma, beta = p["w"], p["b"], p["gamma"], p["beta"]
    din, dout = w.shape
    orig = x.shape
    x2 = x.reshape(-1, din)
    n = x2.shape[0]
    tm = _pick_tile(n, tm, x.dtype)
    n_pad = _round_up(n, tm)
    if n_pad != n:
        x2 = jnp.pad(x2, ((0, n_pad - n), (0, 0)))

    out = pl.pallas_call(
        _linear_ln_relu_kernel,
        out_shape=jax.ShapeDtypeStruct((n_pad, dout), x.dtype),
        grid=(n_pad // tm,),
        in_specs=[
            pl.BlockSpec((tm, din), lambda i: (i, 0)),
            pl.BlockSpec((din, dout), lambda i: (0, 0)),
            pl.BlockSpec((1, dout), lambda i: (0, 0)),
            pl.BlockSpec((1, dout), lambda i: (0, 0)),
            pl.BlockSpec((1, dout), lambda i: (0, 0)),
        ],
        out_specs=pl.BlockSpec((tm, dout), lambda i: (i, 0)),
        compiler_params=pltpu.CompilerParams(dimension_semantics=("parallel",)),
    )(x2, w, b.reshape(1, -1), gamma.reshape(1, -1), beta.reshape(1, -1))
    if n_pad != n:
        out = out[:n]
    return out.reshape(orig[:-1] + (dout,))


# ---------------------------------------------- kernel 2: PreNorm + cross-attention (+res)
def _cross_attn_kernel(x_ref, cpub_ref, cpriv_ref,
                       gq_ref, bq_ref, gc_ref, bc_ref,
                       wq_ref, wk_ref, wv_ref, wo_ref, bo_ref,
                       o_ref, *, scale):
    f32 = jnp.float32
    x = x_ref[...].astype(f32)                                            # (TP, L)
    xn = _layer_norm_f32(x, gq_ref[...].astype(f32), bq_ref[...].astype(f32))
    q = jnp.dot(xn.astype(x_ref.dtype), wq_ref[...],
                preferred_element_type=f32)                               # (TP, I)

    gc = gc_ref[...].astype(f32).reshape(1, 1, -1)
    bc = bc_ref[...].astype(f32).reshape(1, 1, -1)
    tp, kk, d = cpub_ref.shape
    kn = _layer_norm_f32(cpub_ref[...].astype(f32), gc, bc)               # (TP, K, D)
    vn = _layer_norm_f32(cpriv_ref[...].astype(f32), gc, bc)

    k = jnp.dot(kn.reshape(tp * kk, d).astype(cpub_ref.dtype), wk_ref[...],
                preferred_element_type=f32).reshape(tp, kk, d)
    v = jnp.dot(vn.reshape(tp * kk, d).astype(cpriv_ref.dtype), wv_ref[...],
                preferred_element_type=f32).reshape(tp, kk, d)

    # scores[p, k] = sum_d q[p, d] * k[p, k, d]  (query length 1 per point ->
    # VPU broadcast-multiply + lane reduction; softmax over K in f32)
    s = jnp.sum(q[:, None, :] * k, axis=-1) * scale                       # (TP, K)
    s = s - jnp.max(s, axis=-1, keepdims=True)
    e = jnp.exp(s)
    a = e / jnp.sum(e, axis=-1, keepdims=True)
    o = jnp.sum(a[:, :, None] * v, axis=1)                                # (TP, D)

    y = jnp.dot(o.astype(x_ref.dtype), wo_ref[...], preferred_element_type=f32)
    y = y + bo_ref[...].astype(f32) + x                                   # + residual
    o_ref[...] = y.astype(o_ref.dtype)


def cross_attention(point_public, ctx_pub, ctx_priv, p, *, tp=32):
    n, latent = point_public.shape
    K, d = ctx_pub.shape[1], ctx_pub.shape[2]
    inner = p["wq"].shape[1]
    assert inner == d, "AttentionFusion requires inner_dim == context dim"
    scale = float(inner) ** -0.5

    tp = _pick_tile(n, tp, point_public.dtype)
    n_pad = _round_up(n, tp)
    if n_pad != n:
        pad = n_pad - n
        point_public = jnp.pad(point_public, ((0, pad), (0, 0)))
        ctx_pub = jnp.pad(ctx_pub, ((0, pad), (0, 0), (0, 0)))
        ctx_priv = jnp.pad(ctx_priv, ((0, pad), (0, 0), (0, 0)))

    out = pl.pallas_call(
        functools.partial(_cross_attn_kernel, scale=scale),
        out_shape=jax.ShapeDtypeStruct((n_pad, latent), point_public.dtype),
        grid=(n_pad // tp,),
        in_specs=[
            pl.BlockSpec((tp, latent), lambda i: (i, 0)),
            pl.BlockSpec((tp, K, d), lambda i: (i, 0, 0)),
            pl.BlockSpec((tp, K, d), lambda i: (i, 0, 0)),
            pl.BlockSpec((1, latent), lambda i: (0, 0)),
            pl.BlockSpec((1, latent), lambda i: (0, 0)),
            pl.BlockSpec((1, d), lambda i: (0, 0)),
            pl.BlockSpec((1, d), lambda i: (0, 0)),
            pl.BlockSpec((latent, inner), lambda i: (0, 0)),
            pl.BlockSpec((d, d), lambda i: (0, 0)),
            pl.BlockSpec((d, d), lambda i: (0, 0)),
            pl.BlockSpec((inner, latent), lambda i: (0, 0)),
            pl.BlockSpec((1, latent), lambda i: (0, 0)),
        ],
        out_specs=pl.BlockSpec((tp, latent), lambda i: (i, 0)),
        compiler_params=pltpu.CompilerParams(
            dimension_semantics=("parallel",),
            vmem_limit_bytes=48 << 20),
    )(point_public, ctx_pub, ctx_priv,
      p["ln_q_g"].reshape(1, -1), p["ln_q_b"].reshape(1, -1),
      p["ln_c_g"].reshape(1, -1), p["ln_c_b"].reshape(1, -1),
      p["wq"], p["wk"], p["wv"], p["wo"], p["bo"].reshape(1, -1))
    if n_pad != n:
        out = out[:n]
    return out


# --------------------------------------------- kernel 3: PreNorm + FeedForward(GEGLU) (+res)
def _prenorm_ffn_kernel(x_ref, g_ref, bt_ref, w1_ref, b1_ref, w2_ref, b2_ref,
                        o_ref, acc_ref, *, th):
    h = pl.program_id(1)

    @pl.when(h == 0)
    def _init():
        acc_ref[...] = jnp.zeros_like(acc_ref)

    x = x_ref[...].astype(jnp.float32)
    xn = _layer_norm_f32(x, g_ref[...].astype(jnp.float32),
                         bt_ref[...].astype(jnp.float32)).astype(x_ref.dtype)

    # fused first Linear for this hidden chunk ([value_h | gate_h] packed columns)
    hc = jnp.dot(xn, w1_ref[...], preferred_element_type=jnp.float32)
    hc = hc + b1_ref[...].astype(jnp.float32)
    a = hc[:, :th]
    g = hc[:, th:]
    inter = (a * jax.nn.gelu(g, approximate=False)).astype(x_ref.dtype)   # GEGLU (exact erf)

    acc_ref[...] += jnp.dot(inter, w2_ref[...], preferred_element_type=jnp.float32)

    @pl.when(h == pl.num_programs(1) - 1)
    def _finalize():
        o_ref[...] = (acc_ref[...] + b2_ref[...].astype(jnp.float32) + x).astype(o_ref.dtype)


def prenorm_feed_forward(x, p, *, tm=256, th=256):
    w1, b1, w2, b2 = p["w1"], p["b1"], p["w2"], p["b2"]
    dim = w1.shape[0]
    hidden = w2.shape[0]
    orig = x.shape
    x2 = x.reshape(-1, dim)
    n = x2.shape[0]

    tm = _pick_tile(n, tm, x.dtype)
    th = min(th, hidden)
    assert hidden % th == 0, "hidden chunk must divide the hidden dim"
    assert th % 128 == 0 or th == hidden, "hidden chunk must be lane-aligned"
    n_h = hidden // th

    n_pad = _round_up(n, tm)
    if n_pad != n:
        x2 = jnp.pad(x2, ((0, n_pad - n), (0, 0)))

    # pack first Linear so value/gate columns of chunk h are adjacent
    w1a = w1[:, :hidden].reshape(dim, n_h, th)
    w1b = w1[:, hidden:].reshape(dim, n_h, th)
    w1p = jnp.concatenate([w1a, w1b], axis=2).reshape(dim, 2 * hidden)
    b1a = b1[:hidden].reshape(n_h, th)
    b1b = b1[hidden:].reshape(n_h, th)
    b1p = jnp.concatenate([b1a, b1b], axis=1).reshape(1, 2 * hidden)

    grid = (n_pad // tm, n_h)
    xb = jnp.dtype(x.dtype).itemsize
    wb = jnp.dtype(w1.dtype).itemsize
    blk = (tm * dim * xb + dim * 2 * th * wb + 2 * th * wb
           + th * dim * wb + 3 * dim * wb + tm * dim * xb)
    vmem_limit = int(min(max(2 * blk * 5 // 4 + tm * dim * 4 + (2 << 20), 32 << 20), 64 << 20))

    out = pl.pallas_call(
        functools.partial(_prenorm_ffn_kernel, th=th),
        out_shape=jax.ShapeDtypeStruct((n_pad, dim), x.dtype),
        grid_spec=pltpu.PrefetchScalarGridSpec(
            num_scalar_prefetch=0,
            grid=grid,
            in_specs=[
                pl.BlockSpec((tm, dim), lambda i, h: (i, 0)),        # x tile
                pl.BlockSpec((1, dim), lambda i, h: (0, 0)),         # ln gamma
                pl.BlockSpec((1, dim), lambda i, h: (0, 0)),         # ln beta
                pl.BlockSpec((dim, 2 * th), lambda i, h: (0, h)),    # w1 chunk
                pl.BlockSpec((1, 2 * th), lambda i, h: (0, h)),      # b1 chunk
                pl.BlockSpec((th, dim), lambda i, h: (h, 0)),        # w2 chunk
                pl.BlockSpec((1, dim), lambda i, h: (0, 0)),         # b2
            ],
            out_specs=pl.BlockSpec((tm, dim), lambda i, h: (i, 0)),
            scratch_shapes=[pltpu.VMEM((tm, dim), jnp.float32)],
        ),
        compiler_params=pltpu.CompilerParams(
            dimension_semantics=("parallel", "arbitrary"),
            vmem_limit_bytes=vmem_limit),
    )(x2, p["ln_g"].reshape(1, -1), p["ln_b"].reshape(1, -1), w1p, b1p, w2, b2.reshape(1, -1))
    if n_pad != n:
        out = out[:n]
    return out.reshape(orig)


# ----------------------------------------------------------- kernel 4: Linear + Sigmoid
def _linear_sigmoid_kernel(x_ref, w_ref, b_ref, o_ref):
    y = jnp.dot(x_ref[...], w_ref[...], preferred_element_type=jnp.float32)
    y = y + b_ref[...].astype(jnp.float32)
    o_ref[...] = jax.nn.sigmoid(y).astype(o_ref.dtype)


def linear_sigmoid(x, p, *, tm=512):
    w, b = p["w"], p["b"]
    din, dout = w.shape
    orig = x.shape
    x2 = x.reshape(-1, din)
    n = x2.shape[0]
    tm = _pick_tile(n, tm, x.dtype)
    n_pad = _round_up(n, tm)
    if n_pad != n:
        x2 = jnp.pad(x2, ((0, n_pad - n), (0, 0)))

    out = pl.pallas_call(
        _linear_sigmoid_kernel,
        out_shape=jax.ShapeDtypeStruct((n_pad, dout), x.dtype),
        grid=(n_pad // tm,),
        in_specs=[
            pl.BlockSpec((tm, din), lambda i: (i, 0)),
            pl.BlockSpec((din, dout), lambda i: (0, 0)),
            pl.BlockSpec((1, dout), lambda i: (0, 0)),
        ],
        out_specs=pl.BlockSpec((tm, dout), lambda i: (i, 0)),
        compiler_params=pltpu.CompilerParams(dimension_semantics=("parallel",)),
    )(x2, w, b.reshape(1, -1))
    if n_pad != n:
        out = out[:n]
    return out.reshape(orig[:-1] + (dout,))


# ----------------------------------------------------------------- full forward (image_num=1)
def attention_fusion_forward(params, image_feats, point_feats, mask, inds2d, inds3d):
    """AttentionFusion.forward, image_num == 1 branch, built from the Pallas kernels."""
    c = image_feats.shape[-1]

    point_private = linear_ln_relu(point_feats, params["private_P"])[0]   # .squeeze(0)
    point_public = linear_ln_relu(point_feats, params["public"])[0]

    image_public = linear_ln_relu(image_feats, params["public"])
    image_private = linear_ln_relu(image_feats, params["private_I"])

    # TODO(synk): the data-dependent gather/scatter of get_point_2dfeature stays in XLA;
    # a Pallas version needs scalar-prefetched indices + manual DMA gather (not worth it here).
    base = jnp.ones((mask.shape[0], mask.shape[1], c), dtype=image_feats.dtype)
    p2d_public = base.at[inds3d[:, 0], inds3d[:, 1], :].set(
        image_public[inds2d[:, 0], inds2d[:, 1]])
    p2d_private = base.at[inds3d[:, 0], inds3d[:, 1], :].set(
        image_private[inds2d[:, 0], inds2d[:, 1]])

    # AvgPool2d((64, 1)).squeeze()  (kept in XLA; trivial mean over the K axis)
    image_public_pool = jnp.mean(p2d_public, axis=1)
    image_private_pool = jnp.mean(p2d_private, axis=1)

    # PreNorm + single-head cross-attention + residual (query length 1 per point)
    point_public1 = cross_attention(point_public, p2d_public, p2d_private,
                                    params["cross_attn"])

    # PreNorm + FeedForward(GEGLU) + residual
    point_fused = prenorm_feed_forward(point_public1, params["cross_ff"])

    point_fused_public = linear_sigmoid(
        jnp.concatenate([point_public, point_fused], axis=-1), params["fuse_public"])
    point_feature = linear_sigmoid(
        jnp.concatenate([point_private, point_fused_public], axis=-1), params["fuse_private"])

    modal_dict = {"point_public": point_public, "point_private": point_private,
                  "image_public": image_public_pool, "image_private": image_private_pool}
    return point_feature, modal_dict


# ----------------------------------------------------------------------- params / reference
def _init_linear(key, fan_in, fan_out, dtype, bias=True):
    kw, kb = jax.random.split(key)
    bound = 1.0 / (fan_in ** 0.5)
    w = jax.random.uniform(kw, (fan_in, fan_out), dtype, -bound, bound)
    if not bias:
        return w
    b = jax.random.uniform(kb, (fan_out,), dtype, -bound, bound)
    return w, b


def init_attention_fusion_params(key, dim, latent_dim, mult=4, dtype=jnp.float32):
    # The PyTorch forward only type-checks when dim == latent_dim == heads*dim_head.
    assert dim == latent_dim
    inner = dim  # cross_heads = 1, cross_dim_head = dim
    hidden = latent_dim * mult
    ks = jax.random.split(key, 11)

    def mlp_p(k, d):
        w, b = _init_linear(k, d, d, dtype)
        return {"w": w, "b": b, "gamma": jnp.ones((d,), dtype), "beta": jnp.zeros((d,), dtype)}

    wq = _init_linear(ks[3], latent_dim, inner, dtype, bias=False)
    wk = _init_linear(ks[4], dim, dim, dtype, bias=False)
    wv = _init_linear(ks[5], dim, dim, dtype, bias=False)
    wo, bo = _init_linear(ks[6], inner, latent_dim, dtype)
    w1, b1 = _init_linear(ks[7], latent_dim, 2 * hidden, dtype)
    w2, b2 = _init_linear(ks[8], hidden, latent_dim, dtype)
    wfp, bfp = _init_linear(ks[9], 2 * dim, dim, dtype)
    wfv, bfv = _init_linear(ks[10], 2 * dim, dim, dtype)

    return {
        "private_P": mlp_p(ks[0], latent_dim),
        "public": mlp_p(ks[1], latent_dim),
        "private_I": mlp_p(ks[2], dim),
        "cross_attn": {"ln_q_g": jnp.ones((latent_dim,), dtype),
                       "ln_q_b": jnp.zeros((latent_dim,), dtype),
                       "ln_c_g": jnp.ones((dim,), dtype),
                       "ln_c_b": jnp.zeros((dim,), dtype),
                       "wq": wq, "wk": wk, "wv": wv, "wo": wo, "bo": bo},
        "cross_ff": {"ln_g": jnp.ones((latent_dim,), dtype),
                     "ln_b": jnp.zeros((latent_dim,), dtype),
                     "w1": w1, "b1": b1, "w2": w2, "b2": b2},
        "fuse_public": {"w": wfp, "b": bfp},
        "fuse_private": {"w": wfv, "b": bfv},
    }


def attention_fusion_ref(params, image_feats, point_feats, mask, inds2d, inds3d):
    """Pure-JAX reference mirroring the PyTorch forward (image_num == 1)."""
    def ln(x, g, b):
        mu = jnp.mean(x, axis=-1, keepdims=True)
        var = jnp.mean(jnp.square(x - mu), axis=-1, keepdims=True)
        return (x - mu) * jax.lax.rsqrt(var + LN_EPS) * g + b

    def mlp(x, p):
        return jnp.maximum(ln(x @ p["w"] + p["b"], p["gamma"], p["beta"]), 0.0)

    pa, pf = params["cross_attn"], params["cross_ff"]
    c = image_feats.shape[-1]

    point_private = mlp(point_feats, params["private_P"])[0]
    point_public = mlp(point_feats, params["public"])[0]
    image_public = mlp(image_feats, params["public"])
    image_private = mlp(image_feats, params["private_I"])

    base = jnp.ones((mask.shape[0], mask.shape[1], c), dtype=image_feats.dtype)
    p2d_pub = base.at[inds3d[:, 0], inds3d[:, 1], :].set(image_public[inds2d[:, 0], inds2d[:, 1]])
    p2d_prv = base.at[inds3d[:, 0], inds3d[:, 1], :].set(image_private[inds2d[:, 0], inds2d[:, 1]])
    image_public_pool = jnp.mean(p2d_pub, axis=1)
    image_private_pool = jnp.mean(p2d_prv, axis=1)

    xq = point_public[:, None, :]                                   # [N, 1, L]
    xn = ln(xq, pa["ln_q_g"], pa["ln_q_b"])
    kc = ln(p2d_pub, pa["ln_c_g"], pa["ln_c_b"])
    vc = ln(p2d_prv, pa["ln_c_g"], pa["ln_c_b"])
    q, k, v = xn @ pa["wq"], kc @ pa["wk"], vc @ pa["wv"]
    scale = pa["wq"].shape[1] ** -0.5
    s = jnp.einsum('bnc,bmc->bnm', q, k) * scale
    a = jax.nn.softmax(s, axis=-1)
    o = jnp.einsum('bnm,bmc->bnc', a, v)
    point_public1 = o @ pa["wo"] + pa["bo"] + xq

    hidden = pf["w2"].shape[0]
    h = ln(point_public1, pf["ln_g"], pf["ln_b"]) @ pf["w1"] + pf["b1"]
    av, gt = h[..., :hidden], h[..., hidden:]
    ff = (av * jax.nn.gelu(gt, approximate=False)) @ pf["w2"] + pf["b2"]
    point_fused = (ff + point_public1)[:, 0, :]

    fused_pub = jax.nn.sigmoid(jnp.concatenate([point_public, point_fused], -1)
                               @ params["fuse_public"]["w"] + params["fuse_public"]["b"])
    point_feature = jax.nn.sigmoid(jnp.concatenate([point_private, fused_pub], -1)
                                   @ params["fuse_private"]["w"] + params["fuse_private"]["b"])
    modal = {"point_public": point_public, "point_private": point_private,
             "image_public": image_public_pool, "image_private": image_private_pool}
    return point_feature, modal


# ------------------------------------------------------------------------------------ main
if __name__ == "__main__":
    dim = latent = 128          # module requires dim == latent_dim == heads*dim_head
    mult = 4
    K = 64                      # fixed by AttentionFusion (self.K / AvgPool2d((64,1)))
    H, W = 8, 16
    N = 80                      # points (exercises tile padding in the attention kernel)
    M = 64                      # number of 2D<->3D correspondences

    key = jax.random.PRNGKey(0)
    kp, kx, ki, k2, k3 = jax.random.split(key, 5)
    params = init_attention_fusion_params(kp, dim, latent, mult)

    point_feats = jax.random.normal(kx, (1, N, latent), jnp.float32)
    image_feats = jax.random.normal(ki, (H, W, dim), jnp.float32)
    mask = jnp.ones((N, K), jnp.float32)
    flat3d = jax.random.choice(k2, N * K, (M,), replace=False)        # unique scatter targets
    inds3d = jnp.stack([flat3d // K, flat3d % K], axis=-1).astype(jnp.int32)
    flat2d = jax.random.randint(k3, (M,), 0, H * W)
    inds2d = jnp.stack([flat2d // W, flat2d % W], axis=-1).astype(jnp.int32)

    # --- f32 path vs pure-JAX reference ---------------------------------------------------
    out, modal = attention_fusion_forward(params, image_feats, point_feats, mask, inds2d, inds3d)
    out = jax.block_until_ready(out)
    ref_out, ref_modal = attention_fusion_ref(params, image_feats, point_feats, mask, inds2d, inds3d)

    assert out.shape == (N, dim)
    assert jnp.allclose(out, ref_out, atol=2e-3, rtol=2e-3), "point_feature mismatch"
    for name in ("point_public", "point_private", "image_public", "image_private"):
        assert modal[name].shape == ref_modal[name].shape
        assert jnp.allclose(modal[name], ref_modal[name], atol=2e-3, rtol=2e-3), f"{name} mismatch"

    # --- bf16 fast path (MXU-native operands, f32 accumulation) ---------------------------
    params_bf = jax.tree_util.tree_map(lambda p: p.astype(jnp.bfloat16), params)
    out_bf, _ = attention_fusion_forward(params_bf, image_feats.astype(jnp.bfloat16),
                                         point_feats.astype(jnp.bfloat16), mask, inds2d, inds3d)
    out_bf = jax.block_until_ready(out_bf)
    out_bf32 = out_bf.astype(jnp.float32)
    assert out_bf.shape == (N, dim)
    assert bool(jnp.isfinite(out_bf32).all()), "bf16 path produced non-finite values"
    err = jnp.max(jnp.abs(out_bf32 - ref_out))
    assert err < 1.5e-1, f"bf16 path mismatch (max abs err {err})"

    print("KERNEL_OK")
</pallas_src>

<mosaic_0001>
module attributes {stable_mosaic.version = 11 : i64} {
  func.func @_linear_ln_relu_kernel(%arg0: i32, %arg1: memref<80x128xf32, #tpu.memory_space<vmem>>, %arg2: memref<128x128xf32, #tpu.memory_space<vmem>>, %arg3: memref<1x128xf32, #tpu.memory_space<vmem>>, %arg4: memref<1x128xf32, #tpu.memory_space<vmem>>, %arg5: memref<1x128xf32, #tpu.memory_space<vmem>>, %arg6: memref<80x128xf32, #tpu.memory_space<vmem>>) attributes {dimension_semantics = [#tpu.dimension_semantics<parallel>], iteration_bounds = array<i64: 1>, scalar_prefetch = 0 : i64, scratch_operands = 0 : i64, tpu.core_type = #tpu.core_type<tc>, window_params = [{transform_indices = @transform_0, window_bounds = array<i64: 80, 128>}, {pipeline_mode = #tpu.pipeline_mode<synchronous>, transform_indices = @transform_1, window_bounds = array<i64: 128, 128>}, {pipeline_mode = #tpu.pipeline_mode<synchronous>, transform_indices = @transform_2, window_bounds = array<i64: 1, 128>}, {pipeline_mode = #tpu.pipeline_mode<synchronous>, transform_indices = @transform_3, window_bounds = array<i64: 1, 128>}, {pipeline_mode = #tpu.pipeline_mode<synchronous>, transform_indices = @transform_4, window_bounds = array<i64: 1, 128>}, {transform_indices = @transform_5, window_bounds = array<i64: 80, 128>}]} {
    %c0 = arith.constant 0 : index
    %c0_0 = arith.constant 0 : index
    %0 = vector.load %arg1[%c0, %c0_0] : memref<80x128xf32, #tpu.memory_space<vmem>>, vector<80x128xf32>
    %c0_1 = arith.constant 0 : index
    %c0_2 = arith.constant 0 : index
    %1 = vector.load %arg2[%c0_1, %c0_2] : memref<128x128xf32, #tpu.memory_space<vmem>>, vector<128x128xf32>
    %cst = arith.constant dense<0.000000e+00> : vector<80x128xf32>
    %2 = tpu.matmul %0, %1, %cst {dimension_numbers = #tpu.dot_dimension_numbers<[1], [0], [0], [1], [0, 0, 1, 1], [], []>} : vector<80x128xf32>, vector<128x128xf32>, vector<80x128xf32> -> vector<80x128xf32>
    %c0_3 = arith.constant 0 : index
    %c0_4 = arith.constant 0 : index
    %3 = vector.load %arg3[%c0_3, %c0_4] : memref<1x128xf32, #tpu.memory_space<vmem>>, vector<1x128xf32>
    %4 = vector.broadcast %3 : vector<1x128xf32> to vector<80x128xf32>
    %5 = arith.addf %2, %4 : vector<80x128xf32>
    %c0_5 = arith.constant 0 : index
    %c0_6 = arith.constant 0 : index
    %6 = vector.load %arg4[%c0_5, %c0_6] : memref<1x128xf32, #tpu.memory_space<vmem>>, vector<1x128xf32>
    %c0_7 = arith.constant 0 : index
    %c0_8 = arith.constant 0 : index
    %7 = vector.load %arg5[%c0_7, %c0_8] : memref<1x128xf32, #tpu.memory_space<vmem>>, vector<1x128xf32>
    %cst_9 = arith.constant dense<0.000000e+00> : vector<80xf32>
    %8 = vector.multi_reduction <add>, %5, %cst_9 [1] : vector<80x128xf32> to vector<80xf32>
    %9 = vector.shape_cast %8 : vector<80xf32> to vector<80x1xf32>
    %cst_10 = arith.constant 1.280000e+02 : f32
    %10 = vector.broadcast %cst_10 : f32 to vector<80x1xf32>
    %11 = arith.divf %9, %10 : vector<80x1xf32>
    %12 = vector.broadcast %11 : vector<80x1xf32> to vector<80x128xf32>
    %13 = arith.subf %5, %12 : vector<80x128xf32>
    %14 = arith.mulf %13, %13 : vector<80x128xf32>
    %cst_11 = arith.constant dense<0.000000e+00> : vector<80xf32>
    %15 = vector.multi_reduction <add>, %14, %cst_11 [1] : vector<80x128xf32> to vector<80xf32>
    %16 = vector.shape_cast %15 : vector<80xf32> to vector<80x1xf32>
    %cst_12 = arith.constant 1.280000e+02 : f32
    %17 = vector.broadcast %cst_12 : f32 to vector<80x1xf32>
    %18 = arith.divf %16, %17 : vector<80x1xf32>
    %19 = vector.broadcast %11 : vector<80x1xf32> to vector<80x128xf32>
    %20 = arith.subf %5, %19 : vector<80x128xf32>
    %cst_13 = arith.constant 9.99999974E-6 : f32
    %21 = vector.broadcast %cst_13 : f32 to vector<80x1xf32>
    %22 = arith.addf %18, %21 : vector<80x1xf32>
    %23 = math.rsqrt %22 : vector<80x1xf32>
    %24 = vector.broadcast %23 : vector<80x1xf32> to vector<80x128xf32>
    %25 = arith.mulf %20, %24 : vector<80x128xf32>
    %26 = vector.broadcast %6 : vector<1x128xf32> to vector<80x128xf32>
    %27 = arith.mulf %25, %26 : vector<80x128xf32>
    %28 = vector.broadcast %7 : vector<1x128xf32> to vector<80x128xf32>
    %29 = arith.addf %27, %28 : vector<80x128xf32>
    %cst_14 = arith.constant 0.000000e+00 : f32
    %30 = vector.broadcast %cst_14 : f32 to vector<80x128xf32>
    %31 = arith.maximumf %29, %30 : vector<80x128xf32>
    %c0_15 = arith.constant 0 : index
    %c0_16 = arith.constant 0 : index
    %32 = vector.load %arg6[%c0_15, %c0_16] : memref<80x128xf32, #tpu.memory_space<vmem>>, vector<80x128xf32>
    tpu.vector_store %arg6[%c0_15, %c0_16], %31 {strides = array<i32>} : memref<80x128xf32, #tpu.memory_space<vmem>>, vector<80x128xf32>,
    return
  }
  func.func @transform_0(%arg0: i32) -> (i32, i32) {
    %c0_i32 = arith.constant 0 : i32
    %c0_i32_0 = arith.constant 0 : i32
    return %arg0, %c0_i32 : i32, i32
  }
  func.func @transform_1(%arg0: i32) -> (i32, i32) {
    %c0_i32 = arith.constant 0 : i32
    %c0_i32_0 = arith.constant 0 : i32
    %c0_i32_1 = arith.constant 0 : i32
    return %c0_i32, %c0_i32_0 : i32, i32
  }
  func.func @transform_2(%arg0: i32) -> (i32, i32) {
    %c0_i32 = arith.constant 0 : i32
    %c0_i32_0 = arith.constant 0 : i32
    %c0_i32_1 = arith.constant 0 : i32
    return %c0_i32, %c0_i32_0 : i32, i32
  }
  func.func @transform_3(%arg0: i32) -> (i32, i32) {
    %c0_i32 = arith.constant 0 : i32
    %c0_i32_0 = arith.constant 0 : i32
    %c0_i32_1 = arith.constant 0 : i32
    return %c0_i32, %c0_i32_0 : i32, i32
  }
  func.func @transform_4(%arg0: i32) -> (i32, i32) {
    %c0_i32 = arith.constant 0 : i32
    %c0_i32_0 = arith.constant 0 : i32
    %c0_i32_1 = arith.constant 0 : i32
    return %c0_i32, %c0_i32_0 : i32, i32
  }
  func.func @transform_5(%arg0: i32) -> (i32, i32) {
    %c0_i32 = arith.constant 0 : i32
    %c0_i32_0 = arith.constant 0 : i32
    return %arg0, %c0_i32 : i32, i32
  }
}

</mosaic_0001>

<llo_original>
// kernel: tpu_custom_call.1
$region0: #{tpu_custom_call.1}
  #allocation0 [shape = 'u32[]', space=smem, size = 0x4, offset = 0x4, fixed_abs, tag = 'smem constant byte address 0x4 - core index']
  #allocation1 [shape = 'u32[144,128]{1,0:T(1,128)}', space=vmem, size = 0x12000, scoped, tag = 'internal scratch']
  %s0 = inlined_call_operand.hbm [shape: f32[80,128], index: 0, kind: input, shape index: {}]
  %s1 = inlined_call_operand.hbm [shape: f32[128,128], index: 1, kind: input, shape index: {}]
  %s2 = inlined_call_operand.vmem [shape: f32[1,128], index: 2, kind: input, shape index: {}]
  %s3 = inlined_call_operand.vmem [shape: f32[1,128], index: 3, kind: input, shape index: {}]
  %s4 = inlined_call_operand.vmem [shape: f32[1,128], index: 4, kind: input, shape index: {}]
  %s5 = inlined_call_operand.hbm [shape: f32[80,128], index: 5, kind: output, shape index: {}]
  %s6 = sld [smem:[#allocation0]]
  $region38: #{tpu_custom_call.1} parent=0
    _
  %s8 = ssub.s32 1, %s6
  %s9 = scalar_select 0, %s8, %s6
  $region1: #{tpu_custom_call.1} parent=0
    #allocation2 [shape = 'u8[40960]{0}', space=vmem, size = 0xa000, scoped, tag = 'input window, operand 0, single buffered']
    #allocation3 [shape = 's32[1]{0}', space=sflag, size = 0x4, scoped, tag = 'scoped memory for tpu_custom_call.1']
    #allocation4 [shape = 's32[1]{0}', space=sflag, size = 0x4, scoped, tag = 'scoped memory for tpu_custom_call.1']
    #allocation5 [shape = 'u8[65536]{0}', space=vmem, size = 0x10000, scoped, tag = 'input window, operand 1, single buffered']
    #allocation6 [shape = 's32[1]{0}', space=sflag, size = 0x4, scoped, tag = 'scoped memory for tpu_custom_call.1']
    #allocation7 [shape = 'u8[40960]{0}', space=vmem, size = 0xa000, scoped, tag = 'output window, operand 0, single buffered']
    %10 = vsyncpa [#allocation3], 0
    %11 = vsyncpa [#allocation6], 0
    %12 = vsyncpa [#allocation4], 0
    // Predicated region
    $region2: #{tpu_custom_call.1} parent=1 // pred_check
      _
    $region3: #{tpu_custom_call.1} parent=1 // pred_check_branch
      %14 = sbr.rel (0) target = $region5
    $region4: #{tpu_custom_call.1} parent=1 // pred_region
      %s16 = ssub.s32 1280, 1280
      %17 = vsyncadd [#allocation3], %s16
      %s18 = sshll.u32 [#allocation2], 4
      %s19 = int_to_ptr.vmem [resolvable:$true] %s18
      %24 = dma.hbm_to_vmem [thread:$0]  %s0, 1280, %s19, [#allocation3], 128, 128, 8
    $region5: #{tpu_custom_call.1} parent=1 // pred_fallthru
      _
    // Predicated region
    $region6: #{tpu_custom_call.1} parent=1 // pred_check
      _
    $region7: #{tpu_custom_call.1} parent=1 // pred_check_branch
      %26 = sbr.rel (0) target = $region9
    $region8: #{tpu_custom_call.1} parent=1 // pred_region
      %s28 = ssub.s32 2048, 2048
      %29 = vsyncadd [#allocation6], %s28
      %s30 = sshll.u32 [#allocation5], 4
      %s31 = int_to_ptr.vmem [resolvable:$true] %s30
      %36 = dma.hbm_to_vmem [thread:$0]  %s1, 2048, %s31, [#allocation6], 128, 128, 8
    $region9: #{tpu_custom_call.1} parent=1 // pred_fallthru
      _
    // Predicated region
    $region10: #{tpu_custom_call.1} parent=1 // pred_check
      _
    $region11: #{tpu_custom_call.1} parent=1 // pred_check_branch
      %38 = sbr.rel (0) target = $region13
    $region12: #{tpu_custom_call.1} parent=1 // pred_region
      _
    $region13: #{tpu_custom_call.1} parent=1 // pred_fallthru
      _
    // Predicated region
    $region14: #{tpu_custom_call.1} parent=1 // pred_check
      _
    $region15: #{tpu_custom_call.1} parent=1 // pred_check_branch
      %40 = sbr.rel (0) target = $region17
    $region16: #{tpu_custom_call.1} parent=1 // pred_region
      _
    $region17: #{tpu_custom_call.1} parent=1 // pred_fallthru
      _
    // Predicated region
    $region18: #{tpu_custom_call.1} parent=1 // pred_check
      _
    $region19: #{tpu_custom_call.1} parent=1 // pred_check_branch
      %42 = sbr.rel (0) target = $region21
    $region20: #{tpu_custom_call.1} parent=1 // pred_region
      _
    $region21: #{tpu_custom_call.1} parent=1 // pred_fallthru
      _
    // Predicated region
    $region22: #{tpu_custom_call.1} parent=1 // pred_check
      _
    $region23: #{tpu_custom_call.1} parent=1 // pred_check_branch
      %44 = sbr.rel (0) target = $region25
    $region24: #{tpu_custom_call.1} parent=1 // pred_region
      %45 = dma.done [#allocation3], 1280
    $region25: #{tpu_custom_call.1} parent=1 // pred_fallthru
      _
    // Predicated region
    $region26: #{tpu_custom_call.1} parent=1 // pred_check
      _
    $region27: #{tpu_custom_call.1} parent=1 // pred_check_branch
      %47 = sbr.rel (0) target = $region29
    $region28: #{tpu_custom_call.1} parent=1 // pred_region
      %48 = dma.done [#allocation6], 2048
    $region29: #{tpu_custom_call.1} parent=1 // pred_fallthru
      _
    %v49 = vld [vmem:[#allocation2] sm:$0xff]
    %v50 = vld [vmem:[#allocation2 + $0x8] sm:$0xff]
    %v51 = vld [vmem:[#allocation2 + $0x10] sm:$0xff]
    %v52 = vld [vmem:[#allocation2 + $0x18] sm:$0xff]
    %v53 = vld [vmem:[#allocation2 + $0x20] sm:$0xff]
    %v54 = vld [vmem:[#allocation2 + $0x28] sm:$0xff]
    %v55 = vld [vmem:[#allocation2 + $0x30] sm:$0xff]
    %v56 = vld [vmem:[#allocation2 + $0x38] sm:$0xff]
    %v57 = vld [vmem:[#allocation2 + $0x40] sm:$0xff]
    %v58 = vld [vmem:[#allocation2 + $0x48] sm:$0xff]
    %v59 = vld [vmem:[#allocation5] sm:$0xff]
    %v60 = vld [vmem:[#allocation5 + $0x8] sm:$0xff]
    %v61 = vld [vmem:[#allocation5 + $0x10] sm:$0xff]
    %v62 = vld [vmem:[#allocation5 + $0x18] sm:$0xff]
    %v63 = vld [vmem:[#allocation5 + $0x20] sm:$0xff]
    %v64 = vld [vmem:[#allocation5 + $0x28] sm:$0xff]
    %v65 = vld [vmem:[#allocation5 + $0x30] sm:$0xff]
    %v66 = vld [vmem:[#allocation5 + $0x38] sm:$0xff]
    %v67 = vld [vmem:[#allocation5 + $0x40] sm:$0xff]
    %v68 = vld [vmem:[#allocation5 + $0x48] sm:$0xff]
    %v69 = vld [vmem:[#allocation5 + $0x50] sm:$0xff]
    %v70 = vld [vmem:[#allocation5 + $0x58] sm:$0xff]
    %v71 = vld [vmem:[#allocation5 + $0x60] sm:$0xff]
    %v72 = vld [vmem:[#allocation5 + $0x68] sm:$0xff]
    %v73 = vld [vmem:[#allocation5 + $0x70] sm:$0xff]
    %v74 = vld [vmem:[#allocation5 + $0x78] sm:$0xff]
    %v75 = vld [vmem:[%s2] sm:$0x1]
    %v77 = vlaneseq
    %v78 = vshrl.u32 %v77, 7
    %v79 = vsub.s32 0, %v78
    %v80 = vrot.slane %v75, %v79
    %82 = vmatprep.subr.mxu0 0.0
    %83 = vmatpush1.msra.mxu0 %v59
    %84 = vmatprep.subr.mxu0 0.0
    %85 = vmatpush1.msra.mxu0 %v60
    %86 = vmatprep.subr.mxu0 0.0
    %87 = vmatpush1.msra.mxu0 %v61
    %88 = vmatprep.subr.mxu0 0.0
    %89 = vmatpush1.msra.mxu0 %v62
    %90 = vmatprep.subr.mxu0 0.0
    %91 = vmatpush1.msra.mxu0 %v63
    %92 = vmatprep.subr.mxu0 0.0
    %93 = vmatpush1.msra.mxu0 %v64
    %94 = vmatprep.subr.mxu0 0.0
    %95 = vmatpush1.msra.mxu0 %v65
    %96 = vmatprep.subr.mxu0 0.0
    %97 = vmatpush1.msra.mxu0 %v66
    %98 = vmatprep.subr.mxu0 0.0
    %99 = vmatpush1.msra.mxu0 %v67
    %100 = vmatprep.subr.mxu0 0.0
    %101 = vmatpush1.msra.mxu0 %v68
    %102 = vmatprep.subr.mxu0 0.0
    %103 = vmatpush1.msra.mxu0 %v69
    %104 = vmatprep.subr.mxu0 0.0
    %105 = vmatpush1.msra.mxu0 %v70
    %106 = vmatprep.subr.mxu0 0.0
    %107 = vmatpush1.msra.mxu0 %v71
    %108 = vmatprep.subr.mxu0 0.0
    %109 = vmatpush1.msra.mxu0 %v72
    %110 = vmatprep.subr.mxu0 0.0
    %111 = vmatpush1.msra.mxu0 %v73
    %112 = vmatprep.subr.mxu0 0.0
    %113 = vmatpush1.msra.mxu0 %v74
    %114 = vmatprep.subr.mxu0 0.0
    %115 = vmatpush1.msra.mxu0 0.0
    %116 = vmatprep.subr.mxu0 0.0
    %117 = vmatpush1.msra.mxu0 0.0
    %118 = vmatprep.subr.mxu0 0.0
    %119 = vmatpush1.msra.mxu0 0.0
    %120 = vmatprep.subr.mxu0 0.0
    %121 = vmatpush1.msra.mxu0 0.0
    %122 = vmatprep.subr.mxu0 0.0
    %123 = vmatpush1.msra.mxu0 0.0
    %124 = vmatprep.subr.mxu0 0.0
    %125 = vmatpush1.msra.mxu0 0.0
    %126 = vmatprep.subr.mxu0 0.0
    %127 = vmatpush1.msra.mxu0 0.0
    %128 = vmatprep.subr.mxu0 0.0
    %129 = vmatpush1.msra.mxu0 0.0
    %130 = vmatprep.subr.mxu0 0.0
    %131 = vmatpush1.msra.mxu0 0.0
    %132 = vmatprep.subr.mxu0 0.0
    %133 = vmatpush1.msra.mxu0 0.0
    %134 = vmatprep.subr.mxu0 0.0
    %135 = vmatpush1.msra.mxu0 0.0
    %136 = vmatprep.subr.mxu0 0.0
    %137 = vmatpush1.msra.mxu0 0.0
    %138 = vmatprep.subr.mxu0 0.0
    %139 = vmatpush1.msra.mxu0 0.0
    %140 = vmatprep.subr.mxu0 0.0
    %141 = vmatpush1.msra.mxu0 0.0
    %142 = vmatprep.subr.mxu0 0.0
    %143 = vmatpush1.msra.mxu0 0.0
    %144 = vmatprep.subr.mxu0 0.0
    %145 = vmatpush1.msra.mxu0 0.0
    %146 = vmatprep.mubr.f32.mxu0 0.0
    %147 = vmatmul.mubr.f32.gmra.mrb[0].mxu0 %v49
    %v148 = vpop.f32.mrb[0].mxu0
    %v149 = vadd.f32 %v80, %v148
    %v150 = vpop.f32.mrb[0].mxu0
    %151 = vmatprep.mubr.f32.mxu0 0.0
    %152 = vmatmul.mubr.f32.gmra.mrb[0].mxu0 %v50
    %v153 = vpop.f32.mrb[0].mxu0
    %v154 = vadd.f32 %v80, %v153
    %v155 = vpop.f32.mrb[0].mxu0
    %156 = vmatprep.mubr.f32.mxu0 0.0
    %157 = vmatmul.mubr.f32.gmra.mrb[0].mxu0 %v51
    %v158 = vpop.f32.mrb[0].mxu0
    %v159 = vadd.f32 %v80, %v158
    %v160 = vpop.f32.mrb[0].mxu0
    %161 = vmatprep.mubr.f32.mxu0 0.0
    %162 = vmatmul.mubr.f32.gmra.mrb[0].mxu0 %v52
    %v163 = vpop.f32.mrb[0].mxu0
    %v164 = vadd.f32 %v80, %v163
    %v165 = vpop.f32.mrb[0].mxu0
    %166 = vmatprep.mubr.f32.mxu0 0.0
    %167 = vmatmul.mubr.f32.gmra.mrb[0].mxu0 %v53
    %v168 = vpop.f32.mrb[0].mxu0
    %v169 = vadd.f32 %v80, %v168
    %v170 = vpop.f32.mrb[0].mxu0
    %171 = vmatprep.mubr.f32.mxu0 0.0
    %172 = vmatmul.mubr.f32.gmra.mrb[0].mxu0 %v54
    %v173 = vpop.f32.mrb[0].mxu0
    %v174 = vadd.f32 %v80, %v173
    %v175 = vpop.f32.mrb[0].mxu0
    %176 = vmatprep.mubr.f32.mxu0 0.0
    %177 = vmatmul.mubr.f32.gmra.mrb[0].mxu0 %v55
    %v178 = vpop.f32.mrb[0].mxu0
    %v179 = vadd.f32 %v80, %v178
    %v180 = vpop.f32.mrb[0].mxu0
    %181 = vmatprep.mubr.f32.mxu0 0.0
    %182 = vmatmul.mubr.f32.gmra.mrb[0].mxu0 %v56
    %v183 = vpop.f32.mrb[0].mxu0
    %v184 = vadd.f32 %v80, %v183
    %v185 = vpop.f32.mrb[0].mxu0
    %186 = vmatprep.mubr.f32.mxu0 0.0
    %187 = vmatmul.mubr.f32.gmra.mrb[0].mxu0 %v57
    %v188 = vpop.f32.mrb[0].mxu0
    %v189 = vadd.f32 %v80, %v188
    %v190 = vpop.f32.mrb[0].mxu0
    %191 = vmatprep.mubr.f32.mxu0 0.0
    %192 = vmatmul.mubr.f32.gmra.mrb[0].mxu0 %v58
    %v193 = vpop.f32.mrb[0].mxu0
    %v194 = vadd.f32 %v80, %v193
    %v195 = vpop.f32.mrb[0].mxu0
    %196 = vdwg.mxu0
    %v197 = vld [vmem:[%s3] sm:$0x1]
    %v198 = vld [vmem:[%s4] sm:$0x1]
    %199 = vadd.xlane.f32.xlu0 %v149
    %v200 = vpop.xlane.xlu0 %199
    %201 = vadd.xlane.f32.xlu0 %v154
    %v202 = vpop.xlane.xlu0 %201
    %203 = vadd.xlane.f32.xlu0 %v159
    %v204 = vpop.xlane.xlu0 %203
    %205 = vadd.xlane.f32.xlu0 %v164
    %v206 = vpop.xlane.xlu0 %205
    %207 = vadd.xlane.f32.xlu0 %v169
    %v208 = vpop.xlane.xlu0 %207
    %209 = vadd.xlane.f32.xlu0 %v174
    %v210 = vpop.xlane.xlu0 %209
    %211 = vadd.xlane.f32.xlu0 %v179
    %v212 = vpop.xlane.xlu0 %211
    %213 = vadd.xlane.f32.xlu0 %v184
    %v214 = vpop.xlane.xlu0 %213
    %215 = vadd.xlane.f32.xlu0 %v189
    %v216 = vpop.xlane.xlu0 %215
    %217 = vadd.xlane.f32.xlu0 %v194
    %v218 = vpop.xlane.xlu0 %217
    %v219 = vrcp.pop 128.0
    %v220 = vmul.f32 %v200, %v219
    %v221 = vmul.f32 %v202, %v219
    %v222 = vmul.f32 %v204, %v219
    %v223 = vmul.f32 %v206, %v219
    %v224 = vmul.f32 %v208, %v219
    %v225 = vmul.f32 %v210, %v219
    %v226 = vmul.f32 %v212, %v219
    %v227 = vmul.f32 %v214, %v219
    %v228 = vmul.f32 %v216, %v219
    %v229 = vmul.f32 %v218, %v219
    %v230 = vsub.f32 %v149, %v220
    %v231 = vsub.f32 %v154, %v221
    %v232 = vsub.f32 %v159, %v222
    %v233 = vsub.f32 %v164, %v223
    %v234 = vsub.f32 %v169, %v224
    %v235 = vsub.f32 %v174, %v225
    %v236 = vsub.f32 %v179, %v226
    %v237 = vsub.f32 %v184, %v227
    %v238 = vsub.f32 %v189, %v228
    %v239 = vsub.f32 %v194, %v229
    %v240 = vmul.f32 %v230, %v230
    %v241 = vmul.f32 %v231, %v231
    %v242 = vmul.f32 %v232, %v232
    %v243 = vmul.f32 %v233, %v233
    %v244 = vmul.f32 %v234, %v234
    %v245 = vmul.f32 %v235, %v235
    %v246 = vmul.f32 %v236, %v236
    %v247 = vmul.f32 %v237, %v237
    %v248 = vmul.f32 %v238, %v238
    %v249 = vmul.f32 %v239, %v239
    %250 = vadd.xlane.f32.xlu0 %v240
    %v251 = vpop.xlane.xlu0 %250
    %252 = vadd.xlane.f32.xlu0 %v241
    %v253 = vpop.xlane.xlu0 %252
    %254 = vadd.xlane.f32.xlu0 %v242
    %v255 = vpop.xlane.xlu0 %254
    %256 = vadd.xlane.f32.xlu0 %v243
    %v257 = vpop.xlane.xlu0 %256
    %258 = vadd.xlane.f32.xlu0 %v244
    %v259 = vpop.xlane.xlu0 %258
    %260 = vadd.xlane.f32.xlu0 %v245
    %v261 = vpop.xlane.xlu0 %260
    %262 = vadd.xlane.f32.xlu0 %v246
    %v263 = vpop.xlane.xlu0 %262
    %264 = vadd.xlane.f32.xlu0 %v247
    %v265 = vpop.xlane.xlu0 %264
    %266 = vadd.xlane.f32.xlu0 %v248
    %v267 = vpop.xlane.xlu0 %266
    %268 = vadd.xlane.f32.xlu0 %v249
    %v269 = vpop.xlane.xlu0 %268
    %v270 = vmul.f32 %v251, %v219
    %v271 = vmul.f32 %v253, %v219
    %v272 = vmul.f32 %v255, %v219
    %v273 = vmul.f32 %v257, %v219
    %v274 = vmul.f32 %v259, %v219
    %v275 = vmul.f32 %v261, %v219
    %v276 = vmul.f32 %v263, %v219
    %v277 = vmul.f32 %v265, %v219
    %v278 = vmul.f32 %v267, %v219
    %v279 = vmul.f32 %v269, %v219
    %v280 = vadd.f32 %v270, 1e-05
    %v281 = vadd.f32 %v271, 1e-05
    %v282 = vadd.f32 %v272, 1e-05
    %v283 = vadd.f32 %v273, 1e-05
    %v284 = vadd.f32 %v274, 1e-05
    %v285 = vadd.f32 %v275, 1e-05
    %v286 = vadd.f32 %v276, 1e-05
    %v287 = vadd.f32 %v277, 1e-05
    %v288 = vadd.f32 %v278, 1e-05
    %v289 = vadd.f32 %v279, 1e-05
    %v290 = vrsqrt.pop %v280
    %v291 = vrsqrt.pop %v281
    %v292 = vrsqrt.pop %v282
    %v293 = vrsqrt.pop %v283
    %v294 = vrsqrt.pop %v284
    %v295 = vrsqrt.pop %v285
    %v296 = vrsqrt.pop %v286
    %v297 = vrsqrt.pop %v287
    %v298 = vrsqrt.pop %v288
    %v299 = vrsqrt.pop %v289
    %v300 = vmul.f32 %v230, %v290
    %v301 = vmul.f32 %v231, %v291
    %v302 = vmul.f32 %v232, %v292
    %v303 = vmul.f32 %v233, %v293
    %v304 = vmul.f32 %v234, %v294
    %v305 = vmul.f32 %v235, %v295
    %v306 = vmul.f32 %v236, %v296
    %v307 = vmul.f32 %v237, %v297
    %v308 = vmul.f32 %v238, %v298
    %v309 = vmul.f32 %v239, %v299
    %v311 = vlaneseq
    %v312 = vshrl.u32 %v311, 7
    %v313 = vsub.s32 0, %v312
    %v314 = vrot.slane %v197, %v313
    %v316 = vmul.f32 %v300, %v314
    %v317 = vmul.f32 %v301, %v314
    %v318 = vmul.f32 %v302, %v314
    %v319 = vmul.f32 %v303, %v314
    %v320 = vmul.f32 %v304, %v314
    %v321 = vmul.f32 %v305, %v314
    %v322 = vmul.f32 %v306, %v314
    %v323 = vmul.f32 %v307, %v314
    %v324 = vmul.f32 %v308, %v314
    %v325 = vmul.f32 %v309, %v314
    %v327 = vlaneseq
    %v328 = vshrl.u32 %v327, 7
    %v329 = vsub.s32 0, %v328
    %v330 = vrot.slane %v198, %v329
    %v332 = vadd.f32 %v316, %v330
    %v333 = vadd.f32 %v317, %v330
    %v334 = vadd.f32 %v318, %v330
    %v335 = vadd.f32 %v319, %v330
    %v336 = vadd.f32 %v320, %v330
    %v337 = vadd.f32 %v321, %v330
    %v338 = vadd.f32 %v322, %v330
    %v339 = vadd.f32 %v323, %v330
    %v340 = vadd.f32 %v324, %v330
    %v341 = vadd.f32 %v325, %v330
    %v342 = vmax.f32 %v332, 0.0
    %v343 = vmax.f32 %v333, 0.0
    %v344 = vmax.f32 %v334, 0.0
    %v345 = vmax.f32 %v335, 0.0
    %v346 = vmax.f32 %v336, 0.0
    %v347 = vmax.f32 %v337, 0.0
    %v348 = vmax.f32 %v338, 0.0
    %v349 = vmax.f32 %v339, 0.0
    %v350 = vmax.f32 %v340, 0.0
    %v351 = vmax.f32 %v341, 0.0
    %352 = vst [vmem:[#allocation7] sm:$0xff] %v342
    %353 = vst [vmem:[#allocation7 + $0x8] sm:$0xff] %v343
    %354 = vst [vmem:[#allocation7 + $0x10] sm:$0xff] %v344
    %355 = vst [vmem:[#allocation7 + $0x18] sm:$0xff] %v345
    %356 = vst [vmem:[#allocation7 + $0x20] sm:$0xff] %v346
    %357 = vst [vmem:[#allocation7 + $0x28] sm:$0xff] %v347
    %358 = vst [vmem:[#allocation7 + $0x30] sm:$0xff] %v348
    %359 = vst [vmem:[#allocation7 + $0x38] sm:$0xff] %v349
    %360 = vst [vmem:[#allocation7 + $0x40] sm:$0xff] %v350
    %361 = vst [vmem:[#allocation7 + $0x48] sm:$0xff] %v351
    // Predicated region
    $region30: #{tpu_custom_call.1} parent=1 // pred_check
      _
    $region31: #{tpu_custom_call.1} parent=1 // pred_check_branch
      %363 = sbr.rel (0) target = $region33
    $region32: #{tpu_custom_call.1} parent=1 // pred_region
      %s365 = ssub.s32 1280, 1280
      %366 = vsyncadd [#allocation4], %s365
      %s367 = sshll.u32 [#allocation7], 4
      %s368 = int_to_ptr.vmem [resolvable:$true] %s367
      %373 = dma.vmem_to_hbm [thread:$0]  %s368, 1280, %s5, [#allocation4], 128, 128, 8
    $region33: #{tpu_custom_call.1} parent=1 // pred_fallthru
      _
    // Predicated region
    $region34: #{tpu_custom_call.1} parent=1 // pred_check
      _
    $region35: #{tpu_custom_call.1} parent=1 // pred_check_branch
      %375 = sbr.rel (0) target = $region37
    $region36: #{tpu_custom_call.1} parent=1 // pred_region
      %376 = dma.done [#allocation4], 1280
    $region37: #{tpu_custom_call.1} parent=1 // pred_fallthru
      _
    %377 = vsyncpa [#allocation3], 1
    %378 = vsyncpa [#allocation6], 1
    %379 = vsyncpa [#allocation4], 1

</llo_original>
